<compile_context>
chip_gen: v7x
topology: tpu7x:2x2x1
jax: 0.10.0
libtpu: 0.0.40
codegen_flags: <defaults>
</compile_context>

<pallas_src>
import functools

import jax
import jax.numpy as jnp
from jax.experimental import pallas as pl
from jax.experimental.pallas import tpu as pltpu


def _round_up(x, m):
    return (x + m - 1) // m * m


def _cdiv(a, b):
    return (a + b - 1) // b


def _scoped_vmem_budget():
    """Generation-aware scoped-VMEM budget (bytes) for one TensorCore."""
    try:
        cap = int(pltpu.get_tpu_info().vmem_capacity_bytes)
    except Exception:
        cap = 64 * 1024 * 1024            # conservative (v7x-sized) fallback
    # Leave headroom for Mosaic internal scratch:
    #   v7x  (64 MiB/TC)   -> 48 MiB scoped
    #   v5e/v6e (128 MiB)  -> 96 MiB scoped
    return max(16 * 1024 * 1024,
               min(int(0.75 * cap), cap - 16 * 1024 * 1024))


def _pick_tiling(hw, cin_p, cout_p, cbytes, obytes, tile_budget, min_tiles):
    """Balanced spatial tiling: T tiles of TILE rows (multiple of 8).

    Tiles are sized from the VMEM budget (double-buffered x/f/out tiles), not a
    fixed 1024-row cap, and balanced so spatial padding stays < 8 rows/tile.
    """
    hw8 = _round_up(hw, 8)
    per_row = 2 * (cin_p * cbytes + cout_p * max(cbytes, obytes, 4))
    cap = max(8, min(8192, (tile_budget // per_row) // 8 * 8))
    t = max(_cdiv(hw8, cap), min_tiles)
    t = min(t, max(hw8 // 8, 1))
    t = max(t, 1)
    tile = _round_up(_cdiv(hw8, t), 8)
    return tile, t, tile * t


# ----------------------------- kernels --------------------------------------


def _ffm_psum_kernel(x_ref, w1_ref, shift_ref, psum_ref):
    # Pass 1 (recompute variant): only per-tile GAP column sums are emitted.
    f = jnp.dot(x_ref[0], w1_ref[...], preferred_element_type=jnp.float32)
    f = jnp.maximum(f + shift_ref[...], 0.0)
    psum_ref[0, 0] = jnp.sum(f, axis=0, keepdims=True)            # (1, Cout_p)


def _ffm_features_kernel(x_ref, w1_ref, shift_ref, f_ref, psum_ref):
    # Pass 1 (stored-f variant): write features and per-tile GAP column sums.
    f = jnp.dot(x_ref[0], w1_ref[...], preferred_element_type=jnp.float32)
    f = jnp.maximum(f + shift_ref[...], 0.0)
    f_ref[0] = f.astype(f_ref.dtype)
    psum_ref[0, 0] = jnp.sum(f, axis=0, keepdims=True)


def _ffm_fused_out_kernel(x_ref, w1_ref, shift_ref, gate_ref, out_ref):
    # Pass 2 (recompute variant): recompute f from x and apply the gate.
    f = jnp.dot(x_ref[0], w1_ref[...], preferred_element_type=jnp.float32)
    f = jnp.maximum(f + shift_ref[...], 0.0)
    out_ref[0] = (f * gate_ref[0]).astype(out_ref.dtype)


def _ffm_gate_kernel(f_ref, gate_ref, out_ref):
    # Pass 2 (stored-f variant): out = f * (1 + sigmoid(...)); multiply in the
    # storage dtype (bf16-native VPUs on v6e/v7x; f32 path stays f32).
    f = f_ref[0]
    out_ref[0] = (f * gate_ref[0].astype(f.dtype)).astype(out_ref.dtype)


# ----------------------------- wrappers --------------------------------------


def feature_fusion_module_nhwc(x_nhwc, params, *, compute_dtype=jnp.bfloat16,
                               force_recompute=None):
    """x_nhwc: (N, H, W, Cin). Returns (N, H, W, Cout)."""
    N, H, W, Cin = x_nhwc.shape
    Cout = params["w1"].shape[1]
    HW = H * W
    out_dtype = x_nhwc.dtype
    cbytes = jnp.dtype(compute_dtype).itemsize
    obytes = jnp.dtype(out_dtype).itemsize

    # Fold eval-mode BatchNorm: scale into the conv weight, shift stays.
    eps = 1e-5
    scale = params["bn_gamma"] / jnp.sqrt(params["bn_var"] + eps)
    shift = params["bn_beta"] - params["bn_mean"] * scale
    w1_folded = params["w1"] * scale[None, :]                      # (Cin, Cout)

    # Lane-dense channel padding.
    Cin_p = _round_up(Cin, 128)
    Cout_p = _round_up(Cout, 128)

    # Recompute f in pass 2 (dropping the f HBM roundtrip) whenever re-reading
    # x is cheaper than writing + re-reading f:  2|x| + |out|  vs  |x| + 3|f|.
    recompute = (Cin_p < 2 * Cout_p) if force_recompute is None \
        else bool(force_recompute)

    # Generation-aware VMEM budget and spatial tiling.
    vmem_budget = _scoped_vmem_budget()
    fixed = Cin_p * Cout_p * cbytes + 8 * Cout_p * 4
    tile_budget = max(vmem_budget - fixed - (2 << 20), 1 << 20)
    min_tiles = 2 if N == 1 else 1          # keep both v7x TensorCores fed
    TILE_HW, T, HW_p = _pick_tiling(HW, Cin_p, Cout_p, cbytes, obytes,
                                    tile_budget, min_tiles)
    pad_rows = HW_p - HW
    vmem_limit = int(vmem_budget)

    # Pre-processing (skipped entirely when already aligned).
    x = x_nhwc.reshape(N, HW, Cin)
    if pad_rows or Cin_p != Cin:
        x = jnp.pad(x, ((0, 0), (0, pad_rows), (0, Cin_p - Cin)))
    if x.dtype != jnp.dtype(compute_dtype):
        x = x.astype(compute_dtype)
    w1p = w1_folded
    if Cin_p != Cin or Cout_p != Cout:
        w1p = jnp.pad(w1p, ((0, Cin_p - Cin), (0, Cout_p - Cout)))
    w1p = w1p.astype(compute_dtype)
    shiftp = shift
    if Cout_p != Cout:
        shiftp = jnp.pad(shiftp, (0, Cout_p - Cout))
    shiftp = shiftp.astype(jnp.float32).reshape(1, Cout_p)

    compiler_params = pltpu.CompilerParams(
        dimension_semantics=("parallel", "parallel"),
        vmem_limit_bytes=vmem_limit)

    x_spec = pl.BlockSpec((1, TILE_HW, Cin_p), lambda b, t: (b, t, 0))
    w_spec = pl.BlockSpec((Cin_p, Cout_p), lambda b, t: (0, 0))
    s_spec = pl.BlockSpec((1, Cout_p), lambda b, t: (0, 0))
    f_spec = pl.BlockSpec((1, TILE_HW, Cout_p), lambda b, t: (b, t, 0))
    g_spec = pl.BlockSpec((1, 1, Cout_p), lambda b, t: (b, 0, 0))
    psum_spec = pl.BlockSpec((1, 1, 1, Cout_p), lambda b, t: (b, t, 0, 0))
    psum_shape = jax.ShapeDtypeStruct((N, T, 1, Cout_p), jnp.float32)

    matmul_flops = 2 * N * HW_p * Cin_p * Cout_p
    x_bytes = N * HW_p * Cin_p * cbytes
    f_bytes = N * HW_p * Cout_p * cbytes
    o_bytes = N * HW_p * Cout_p * obytes
    w_bytes = Cin_p * Cout_p * cbytes
    p_bytes = N * T * Cout_p * 4

    # ---- Pass 1: features and/or per-tile GAP partial sums -----------------
    if recompute:
        psum = pl.pallas_call(
            _ffm_psum_kernel,
            out_shape=psum_shape,
            grid_spec=pltpu.PrefetchScalarGridSpec(
                num_scalar_prefetch=0, grid=(N, T),
                in_specs=[x_spec, w_spec, s_spec],
                out_specs=psum_spec),
            compiler_params=compiler_params,
            cost_estimate=pl.CostEstimate(
                flops=matmul_flops, transcendentals=0,
                bytes_accessed=x_bytes + w_bytes + p_bytes),
        )(x, w1p, shiftp)
        f = None
    else:
        f, psum = pl.pallas_call(
            _ffm_features_kernel,
            out_shape=(jax.ShapeDtypeStruct((N, HW_p, Cout_p), compute_dtype),
                       psum_shape),
            grid_spec=pltpu.PrefetchScalarGridSpec(
                num_scalar_prefetch=0, grid=(N, T),
                in_specs=[x_spec, w_spec, s_spec],
                out_specs=[f_spec, psum_spec]),
            compiler_params=compiler_params,
            cost_estimate=pl.CostEstimate(
                flops=matmul_flops, transcendentals=0,
                bytes_accessed=x_bytes + f_bytes + w_bytes + p_bytes),
        )(x, w1p, shiftp)

    # ---- Tiny attention MLP on the pooled vector (plain XLA, f32) ----------
    # Zero-padded spatial rows of x each contribute exactly ReLU(shift) to the
    # column sums, so correct analytically instead of masking in-kernel.
    total = psum[:, :, 0, :Cout].sum(axis=1)                       # (N, Cout)
    total = total - float(pad_rows) * jnp.maximum(shift, 0.0)[None, :]
    pooled = total / HW
    a = jnp.maximum(pooled @ params["wa1"] + params["ba1"], 0.0)
    wgt = jax.nn.sigmoid(a @ params["wa2"] + params["ba2"])
    gate = (1.0 + wgt).astype(jnp.float32)                         # out = f*(1+w)
    if Cout_p != Cout:
        gate = jnp.pad(gate, ((0, 0), (0, Cout_p - Cout)))
    gate_p = gate.reshape(N, 1, Cout_p)

    out_shape = jax.ShapeDtypeStruct((N, HW_p, Cout_p), out_dtype)

    # ---- Pass 2: apply the gate ---------------------------------------------
    if recompute:
        out = pl.pallas_call(
            _ffm_fused_out_kernel,
            out_shape=out_shape,
            grid_spec=pltpu.PrefetchScalarGridSpec(
                num_scalar_prefetch=0, grid=(N, T),
                in_specs=[x_spec, w_spec, s_spec, g_spec],
                out_specs=f_spec),
            compiler_params=compiler_params,
            cost_estimate=pl.CostEstimate(
                flops=matmul_flops + N * HW_p * Cout_p, transcendentals=0,
                bytes_accessed=x_bytes + o_bytes + w_bytes),
        )(x, w1p, shiftp, gate_p)
    else:
        alias = ({0: 0}
                 if jnp.dtype(compute_dtype) == jnp.dtype(out_dtype) else {})
        out = pl.pallas_call(
            _ffm_gate_kernel,
            out_shape=out_shape,
            grid_spec=pltpu.PrefetchScalarGridSpec(
                num_scalar_prefetch=0, grid=(N, T),
                in_specs=[f_spec, g_spec],
                out_specs=f_spec),
            compiler_params=compiler_params,
            cost_estimate=pl.CostEstimate(
                flops=N * HW_p * Cout_p, transcendentals=0,
                bytes_accessed=f_bytes + o_bytes),
            input_output_aliases=alias,
        )(f, gate_p)

    # TODO(synk): a downstream NHWC consumer could take the padded
    # (N, HW_p, Cout_p) slab directly (or the tiny (N, Cout) gate for fusion)
    # and skip this slice/reshape roundtrip.
    if pad_rows or Cout_p != Cout:
        out = out[:, :HW, :Cout]
    return out.reshape(N, H, W, Cout)


def feature_fusion_module(x_nchw, params, *, compute_dtype=jnp.bfloat16,
                          force_recompute=None):
    """NCHW wrapper matching the PyTorch module interface."""
    # TODO(synk): keep the surrounding BiSeNet in NHWC to eliminate these two
    # full HBM-roundtrip transposes around a memory-bound kernel.
    x_nhwc = jnp.transpose(x_nchw, (0, 2, 3, 1))
    out = feature_fusion_module_nhwc(x_nhwc, params,
                                     compute_dtype=compute_dtype,
                                     force_recompute=force_recompute)
    return jnp.transpose(out, (0, 3, 1, 2))


# ----------------------------- reference / test ------------------------------


def _reference(x_nchw, params):
    """Pure-JAX f32 reference of the PyTorch forward (eval mode)."""
    eps = 1e-5
    N, Cin, H, W = x_nchw.shape
    Cout = params["w1"].shape[1]
    xf = jnp.transpose(x_nchw, (0, 2, 3, 1)).reshape(N, H * W, Cin)
    f = xf @ params["w1"]
    scale = params["bn_gamma"] / jnp.sqrt(params["bn_var"] + eps)
    shift = params["bn_beta"] - params["bn_mean"] * scale
    f = jnp.maximum(f * scale + shift, 0.0)
    pooled = jnp.mean(f, axis=1, keepdims=True)
    a = jnp.maximum(pooled @ params["wa1"] + params["ba1"], 0.0)
    w = jax.nn.sigmoid(a @ params["wa2"] + params["ba2"])
    out = f + f * w
    return jnp.transpose(out.reshape(N, H, W, Cout), (0, 3, 1, 2))


def _init_params(key, in_channels, out_channels):
    ks = jax.random.split(key, 8)
    # conv 1x1 (no bias): torch (Cout, Cin, 1, 1) -> stored as (Cin, Cout)
    w1 = jax.random.normal(ks[0], (in_channels, out_channels), jnp.float32) * 0.1
    bn_gamma = 1.0 + 0.1 * jax.random.normal(ks[1], (out_channels,), jnp.float32)
    bn_beta = 0.1 * jax.random.normal(ks[2], (out_channels,), jnp.float32)
    bn_mean = 0.05 * jax.random.normal(ks[3], (out_channels,), jnp.float32)
    bn_var = jnp.abs(jax.random.normal(ks[4], (out_channels,), jnp.float32)) + 0.5
    # attention convs (1x1, with bias): stored as (Cout, Cout) matmul weights
    wa1 = jax.random.normal(ks[5], (out_channels, out_channels), jnp.float32) * 0.1
    ba1 = 0.05 * jax.random.normal(ks[6], (out_channels,), jnp.float32)
    wa2 = jax.random.normal(ks[7], (out_channels, out_channels), jnp.float32) * 0.1
    ba2 = jnp.zeros((out_channels,), jnp.float32)
    return dict(w1=w1, bn_gamma=bn_gamma, bn_beta=bn_beta, bn_mean=bn_mean,
                bn_var=bn_var, wa1=wa1, ba1=ba1, wa2=wa2, ba2=ba2)


if __name__ == "__main__":
    key = jax.random.PRNGKey(0)
    k1, k2, k3 = jax.random.split(key, 3)

    # Config A: aligned spatial size (no padding), batch=2.
    N, Cin, Cout, H, W = 2, 8, 4, 16, 16
    x = jax.random.normal(k1, (N, Cin, H, W), jnp.float32)
    params = _init_params(k2, Cin, Cout)
    ref = _reference(x, params)

    # f32, recompute (default decision for Cin_p < 2*Cout_p) path.
    out_f32 = jax.block_until_ready(
        feature_fusion_module(x, params, compute_dtype=jnp.float32))
    assert out_f32.shape == (N, Cout, H, W)
    assert jnp.allclose(out_f32, ref, atol=1e-5, rtol=1e-5), "f32 recompute mismatch"

    # f32, forced stored-f path (exercises the aliased gate pass).
    out_f32_s = jax.block_until_ready(
        feature_fusion_module(x, params, compute_dtype=jnp.float32,
                              force_recompute=False))
    assert jnp.allclose(out_f32_s, ref, atol=1e-5, rtol=1e-5), "f32 stored-f mismatch"

    # bf16 production default (half HBM traffic): loose tolerance vs f32 ref.
    out_bf16 = jax.block_until_ready(feature_fusion_module(x, params))
    assert out_bf16.shape == (N, Cout, H, W)
    assert jnp.allclose(out_bf16, ref, atol=5e-2, rtol=5e-2), "bf16 mismatch"

    # Config B: odd spatial size (exercises spatial padding + analytic GAP
    # correction) and batch=1 (exercises the T>=2 megacore split).
    N2, H2, W2 = 1, 15, 9
    x2 = jax.random.normal(k3, (N2, Cin, H2, W2), jnp.float32)
    ref2 = _reference(x2, params)
    out2 = jax.block_until_ready(
        feature_fusion_module(x2, params, compute_dtype=jnp.float32))
    assert out2.shape == (N2, Cout, H2, W2)
    assert jnp.allclose(out2, ref2, atol=1e-5, rtol=1e-5), "padded-GAP recompute mismatch"
    out2_s = jax.block_until_ready(
        feature_fusion_module(x2, params, compute_dtype=jnp.float32,
                              force_recompute=False))
    assert jnp.allclose(out2_s, ref2, atol=1e-5, rtol=1e-5), "padded-GAP stored mismatch"

    print("KERNEL_OK")
</pallas_src>

<mosaic_0001>
module attributes {stable_mosaic.version = 11 : i64} {
  func.func @_ffm_psum_kernel(%arg0: i32, %arg1: i32, %arg2: memref<1x256x128xf32, #tpu.memory_space<vmem>>, %arg3: memref<128x128xf32, #tpu.memory_space<vmem>>, %arg4: memref<1x128xf32, #tpu.memory_space<vmem>>, %arg5: memref<1x1x1x128xf32, #tpu.memory_space<vmem>>) attributes {dimension_semantics = [#tpu.dimension_semantics<parallel>, #tpu.dimension_semantics<parallel>], iteration_bounds = array<i64: 2, 1>, scalar_prefetch = 0 : i64, scratch_operands = 0 : i64, tpu.core_type = #tpu.core_type<tc>, window_params = [{transform_indices = @transform_0, window_bounds = array<i64: 1, 256, 128>}, {pipeline_mode = #tpu.pipeline_mode<synchronous>, transform_indices = @transform_1, window_bounds = array<i64: 128, 128>}, {pipeline_mode = #tpu.pipeline_mode<synchronous>, transform_indices = @transform_2, window_bounds = array<i64: 1, 128>}, {transform_indices = @transform_3, window_bounds = array<i64: 1, 1, 1, 128>}]} {
    %c0 = arith.constant 0 : index
    %c0_0 = arith.constant 0 : index
    %c0_1 = arith.constant 0 : index
    %0 = vector.load %arg2[%c0, %c0_0, %c0_1] : memref<1x256x128xf32, #tpu.memory_space<vmem>>, vector<1x256x128xf32>
    %1 = vector.shape_cast %0 : vector<1x256x128xf32> to vector<256x128xf32>
    %c0_2 = arith.constant 0 : index
    %c0_3 = arith.constant 0 : index
    %2 = vector.load %arg3[%c0_2, %c0_3] : memref<128x128xf32, #tpu.memory_space<vmem>>, vector<128x128xf32>
    %cst = arith.constant dense<0.000000e+00> : vector<256x128xf32>
    %3 = tpu.matmul %1, %2, %cst {dimension_numbers = #tpu.dot_dimension_numbers<[1], [0], [0], [1], [0, 0, 1, 1], [], []>} : vector<256x128xf32>, vector<128x128xf32>, vector<256x128xf32> -> vector<256x128xf32>
    %c0_4 = arith.constant 0 : index
    %c0_5 = arith.constant 0 : index
    %4 = vector.load %arg4[%c0_4, %c0_5] : memref<1x128xf32, #tpu.memory_space<vmem>>, vector<1x128xf32>
    %5 = vector.broadcast %4 : vector<1x128xf32> to vector<256x128xf32>
    %6 = arith.addf %3, %5 : vector<256x128xf32>
    %cst_6 = arith.constant 0.000000e+00 : f32
    %7 = vector.broadcast %cst_6 : f32 to vector<256x128xf32>
    %8 = arith.maximumf %6, %7 : vector<256x128xf32>
    %cst_7 = arith.constant dense<0.000000e+00> : vector<128xf32>
    %9 = vector.multi_reduction <add>, %8, %cst_7 [0] : vector<256x128xf32> to vector<128xf32>
    %10 = vector.shape_cast %9 : vector<128xf32> to vector<1x128xf32>
    %c0_8 = arith.constant 0 : index
    %c0_9 = arith.constant 0 : index
    %c0_10 = arith.constant 0 : index
    %c0_11 = arith.constant 0 : index
    %11 = vector.load %arg5[%c0_8, %c0_9, %c0_10, %c0_11] : memref<1x1x1x128xf32, #tpu.memory_space<vmem>>, vector<1x1x1x128xf32>
    %12 = vector.shape_cast %11 : vector<1x1x1x128xf32> to vector<1x128xf32>
    %13 = vector.shape_cast %10 : vector<1x128xf32> to vector<1x1x1x128xf32>
    tpu.vector_store %arg5[%c0_8, %c0_9, %c0_10, %c0_11], %13 {strides = array<i32>} : memref<1x1x1x128xf32, #tpu.memory_space<vmem>>, vector<1x1x1x128xf32>,
    return
  }
  func.func @transform_0(%arg0: i32, %arg1: i32) -> (i32, i32, i32) {
    %c0_i32 = arith.constant 0 : i32
    %c0_i32_0 = arith.constant 0 : i32
    return %arg0, %arg1, %c0_i32 : i32, i32, i32
  }
  func.func @transform_1(%arg0: i32, %arg1: i32) -> (i32, i32) {
    %c0_i32 = arith.constant 0 : i32
    %c0_i32_0 = arith.constant 0 : i32
    %c0_i32_1 = arith.constant 0 : i32
    return %c0_i32, %c0_i32_0 : i32, i32
  }
  func.func @transform_2(%arg0: i32, %arg1: i32) -> (i32, i32) {
    %c0_i32 = arith.constant 0 : i32
    %c0_i32_0 = arith.constant 0 : i32
    %c0_i32_1 = arith.constant 0 : i32
    return %c0_i32, %c0_i32_0 : i32, i32
  }
  func.func @transform_3(%arg0: i32, %arg1: i32) -> (i32, i32, i32, i32) {
    %c0_i32 = arith.constant 0 : i32
    %c0_i32_0 = arith.constant 0 : i32
    %c0_i32_1 = arith.constant 0 : i32
    return %arg0, %arg1, %c0_i32, %c0_i32_0 : i32, i32, i32, i32
  }
}

</mosaic_0001>

<llo_original>
// kernel: tpu_custom_call.1
$region0: #{tpu_custom_call.1}
  #allocation0 [shape = 'u32[]', space=smem, size = 0x4, offset = 0x4, fixed_abs, tag = 'smem constant byte address 0x4 - core index']
  #allocation1 [shape = 'u32[144,128]{1,0:T(1,128)}', space=vmem, size = 0x12000, scoped, tag = 'internal scratch']
  %s0 = inlined_call_operand.hbm [shape: f32[2,256,128], index: 0, kind: input, shape index: {}]
  %s1 = inlined_call_operand.hbm [shape: f32[128,128], index: 1, kind: input, shape index: {}]
  %s2 = inlined_call_operand.vmem [shape: f32[1,128], index: 2, kind: input, shape index: {}]
  %s3 = inlined_call_operand.hbm [shape: f32[2,1,1,128], index: 3, kind: output, shape index: {}]
  %s4 = sld [smem:[#allocation0]]
  $region53: #{tpu_custom_call.1} parent=0
    _
  %s6 = ssub.s32 1, %s4
  %s7 = scalar_select 0, %s6, %s4
  $region1: #{tpu_custom_call.1} parent=0
    #allocation2 [shape = 'u8[262144]{0}', space=vmem, size = 0x40000, scoped, tag = 'input window, operand 0']
    #allocation3 [shape = 's32[2]{0}', space=sflag, size = 0x8, scoped, tag = 'scoped memory for tpu_custom_call.1']
    #allocation4 [shape = 's32[2]{0}', space=sflag, size = 0x8, scoped, tag = 'scoped memory for tpu_custom_call.1']
    #allocation5 [shape = 'u8[65536]{0}', space=vmem, size = 0x10000, scoped, tag = 'input window, operand 1, single buffered']
    #allocation6 [shape = 's32[1]{0}', space=sflag, size = 0x4, scoped, tag = 'scoped memory for tpu_custom_call.1']
    #allocation7 [shape = 'u8[1024]{0}', space=vmem, size = 0x400, scoped, tag = 'output window, operand 0']
    %8 = vsyncpa [#allocation3], 0
    %s9 = scalar_lea.sflag [#allocation3], 1
    %10 = vsyncpa %s9, 0
    %11 = vsyncpa [#allocation6], 0
    %12 = vsyncpa [#allocation4], 0
    %s13 = scalar_lea.sflag [#allocation4], 1
    %14 = vsyncpa %s13, 0
    loop: start=0, step=1, limit=4
    $region2: #{tpu_custom_call.1} parent=1 // loop_pre_header
      _
    $region3: #{tpu_custom_call.1} parent=1 // loop_header
      %s16 = sphi 0, %s20
      %p17 = scmp.ge.s32.totalorder %s16, 4
      %s23 = sphi 0, %s35
      %s24 = sphi 0, %s31
      %s25 = sphi 0, %s23
      %s26 = sphi 0, %s24
      %s27 = sphi 0, %s25
      %s28 = sphi 0, %s26
      %s40 = sphi 0, %s42
      %s43 = sphi 0, %s40
      %s44 = sphi 0, %s43
      %s60 = sphi 0, %s44
      %s64 = sphi 0, %s64
      %s66 = sphi 0, %s64
      %s67 = sphi 0, %s66
      %s81 = sphi 0, %s67
      %s85 = sphi 0, %s85
      %s87 = sphi 0, %s85
      %s88 = sphi 0, %s87
      %s102 = sphi 0, %s88
      %s110 = sphi 0, %s112
      %s113 = sphi 0, %s110
      %s114 = sphi 0, %s113
      %s130 = sphi 0, %s114
    $region4: #{tpu_custom_call.1} parent=1 // loop_header_branch
      %19 = sbr.rel (%p17) target = $region8
    $region5: #{tpu_custom_call.1} parent=1 // loop_body
      %s21 = ssub.s32 %s16, 1
      %s22 = ssub.s32 %s16, 2
      %s29 = sadd.s32 1, %s24
      %p30 = scmp.ge.s32.totalorder %s29, 1
      %s31 = scalar_select %p30, 0, %s29
      %s32 = sadd.s32 1, %s23
      %s33 = scalar_select %p30, %s32, %s23
      %p34 = scmp.ge.s32.totalorder %s33, 2
      %s35 = scalar_select %p34, 0, %s33
      %s36 = ssub.s32 %s23, %s35
      %s37 = ssub.s32 %s24, %s31
      %s38 = sor.u32 %s36, %s37
      %p39 = scmp.eq.s32.totalorder %s38, 0
      %s41 = sadd.s32 %s40, 1
      %s42 = scalar_select %p39, %s40, %s41
      %p45 = pneg %p39
      %p46 = scmp.eq.s32.totalorder %s16, 1
      %p47 = por %p45, %p46
      %p48 = scmp.ne.s32.totalorder %s40, %s43
      %p49 = scmp.eq.s32.totalorder %s16, 0
      %p50 = por %p48, %p49
      %p51 = scmp.ne.s32.totalorder %s40, %s43
      %p52 = scmp.eq.s32.totalorder %s21, 1
      %p53 = por %p51, %p52
      %p54 = scmp.ne.s32.totalorder %s43, %s44
      %p55 = scmp.eq.s32.totalorder %s21, 0
      %p56 = por %p54, %p55
      %p57 = scmp.ne.s32.totalorder %s43, %s44
      %p58 = scmp.eq.s32.totalorder %s22, 1
      %p59 = por %p57, %p58
      %p61 = scmp.ne.s32.totalorder %s44, %s60
      %p62 = scmp.eq.s32.totalorder %s22, 0
      %p63 = por %p61, %p62
      %s65 = sadd.s32 %s64, 1
      %p68 = scmp.eq.s32.totalorder %s16, 1
      %p69 = scmp.ne.s32.totalorder %s64, %s66
      %p70 = scmp.eq.s32.totalorder %s16, 0
      %p71 = por %p69, %p70
      %p72 = scmp.ne.s32.totalorder %s64, %s66
      %p73 = scmp.eq.s32.totalorder %s21, 1
      %p74 = por %p72, %p73
      %p75 = scmp.ne.s32.totalorder %s66, %s67
      %p76 = scmp.eq.s32.totalorder %s21, 0
      %p77 = por %p75, %p76
      %p78 = scmp.ne.s32.totalorder %s66, %s67
      %p79 = scmp.eq.s32.totalorder %s22, 1
      %p80 = por %p78, %p79
      %p82 = scmp.ne.s32.totalorder %s67, %s81
      %p83 = scmp.eq.s32.totalorder %s22, 0
      %p84 = por %p82, %p83
      %s86 = sadd.s32 %s85, 1
      %p89 = scmp.eq.s32.totalorder %s16, 1
      %p90 = scmp.ne.s32.totalorder %s85, %s87
      %p91 = scmp.eq.s32.totalorder %s16, 0
      %p92 = por %p90, %p91
      %p93 = scmp.ne.s32.totalorder %s85, %s87
      %p94 = scmp.eq.s32.totalorder %s21, 1
      %p95 = por %p93, %p94
      %p96 = scmp.ne.s32.totalorder %s87, %s88
      %p97 = scmp.eq.s32.totalorder %s21, 0
      %p98 = por %p96, %p97
      %p99 = scmp.ne.s32.totalorder %s87, %s88
      %p100 = scmp.eq.s32.totalorder %s22, 1
      %p101 = por %p99, %p100
      %p103 = scmp.ne.s32.totalorder %s88, %s102
      %p104 = scmp.eq.s32.totalorder %s22, 0
      %p105 = por %p103, %p104
      %s106 = ssub.s32 %s23, %s35
      %s107 = ssub.s32 %s24, %s31
      %s108 = sor.u32 %s106, %s107
      %p109 = scmp.eq.s32.totalorder %s108, 0
      %s111 = sadd.s32 %s110, 1
      %s112 = scalar_select %p109, %s110, %s111
      %p115 = pneg %p109
      %p116 = scmp.eq.s32.totalorder %s16, 1
      %p117 = por %p115, %p116
      %p118 = scmp.ne.s32.totalorder %s110, %s113
      %p119 = scmp.eq.s32.totalorder %s16, 0
      %p120 = por %p118, %p119
      %p121 = scmp.ne.s32.totalorder %s110, %s113
      %p122 = scmp.eq.s32.totalorder %s21, 1
      %p123 = por %p121, %p122
      %p124 = scmp.ne.s32.totalorder %s113, %s114
      %p125 = scmp.eq.s32.totalorder %s21, 0
      %p126 = por %p124, %p125
      %p127 = scmp.ne.s32.totalorder %s113, %s114
      %p128 = scmp.eq.s32.totalorder %s22, 1
      %p129 = por %p127, %p128
      %p131 = scmp.ne.s32.totalorder %s114, %s130
      %p132 = scmp.eq.s32.totalorder %s22, 0
      %p133 = por %p131, %p132
      %p134 = scmp.le.s32.totalorder 1, %s16
      %p135 = scmp.lt.s32.totalorder %s16, 3
      %p136 = pnand %p134, %p135
      %p137 = pneg %p136
      // Predicated region
      $region9: #{tpu_custom_call.1} parent=5 // pred_check
        _
      $region10: #{tpu_custom_call.1} parent=5 // pred_check_branch
        %139 = sbr.rel (%p136) target = $region12
      $region11: #{tpu_custom_call.1} parent=5 // pred_region
        %s140 = ssub.s32 %s16, 1
        // Predicated region
        $region13: #{tpu_custom_call.1} parent=11 // pred_check
          %p141 = pneg %p77
        $region14: #{tpu_custom_call.1} parent=11 // pred_check_branch
          %143 = sbr.rel (%p141) target = $region16
        $region15: #{tpu_custom_call.1} parent=11 // pred_region
          %s145 = ssub.s32 2048, 2048
          %146 = vsyncadd [#allocation6], %s145
          %s147 = sshll.u32 [#allocation5], 4
          %s148 = int_to_ptr.vmem [resolvable:$true] %s147
          %153 = dma.hbm_to_vmem [thread:$0]  %s1, 2048, %s148, [#allocation6], 128, 128, 8
        $region16: #{tpu_custom_call.1} parent=11 // pred_fallthru
          _
        // Predicated region
        $region17: #{tpu_custom_call.1} parent=11 // pred_check
          %p154 = pneg %p98
        $region18: #{tpu_custom_call.1} parent=11 // pred_check_branch
          %156 = sbr.rel (%p154) target = $region20
        $region19: #{tpu_custom_call.1} parent=11 // pred_region
          _
        $region20: #{tpu_custom_call.1} parent=11 // pred_fallthru
          _
      $region12: #{tpu_custom_call.1} parent=5 // pred_fallthru
        _
      %p157 = scmp.lt.s32.totalorder %s16, 2
      // Predicated region
      $region21: #{tpu_custom_call.1} parent=5 // pred_check
        %p158 = pneg %p157
      $region22: #{tpu_custom_call.1} parent=5 // pred_check_branch
        %160 = sbr.rel (%p158) target = $region24
      $region23: #{tpu_custom_call.1} parent=5 // pred_region
        // Predicated region
        $region25: #{tpu_custom_call.1} parent=23 // pred_check
          %p161 = pneg %p50
        $region26: #{tpu_custom_call.1} parent=23 // pred_check_branch
          %163 = sbr.rel (%p161) target = $region28
        $region27: #{tpu_custom_call.1} parent=23 // pred_region
          %s164 = sand.u32 %s40, 1
          %s165 = scalar_lea.sflag [#allocation3], %s164
          %s166 = sand.u32 %s40, 1
          %s167 = smul.addr %s166, 256
          %s168 = scalar_lea.vmem [#allocation2], %s167
          %s169 = smul.u32 32, %s24
          %s171 = ssub.s32 4096, 4096
          %172 = vsyncadd %s165, %s171
          %s173 = smul.addr %s23, 32
          %s174 = sadd.s32 %s169, %s173
          %s175 = smul.addr %s174, 128
          %s176 = scalar_lea.hbm %s0, %s175
          %s177 = sshll.u32 %s168, 4
          %s178 = int_to_ptr.vmem [resolvable:$true] %s177
          %183 = dma.hbm_to_vmem [thread:$0]  %s176, 4096, %s178, %s165, 128, 128, 8
        $region28: #{tpu_custom_call.1} parent=23 // pred_fallthru
          _
      $region24: #{tpu_custom_call.1} parent=5 // pred_fallthru
        _
      %p184 = scmp.le.s32.totalorder 1, %s16
      %p185 = scmp.lt.s32.totalorder %s16, 3
      %p186 = pnand %p184, %p185
      %p187 = pneg %p186
      // Predicated region
      $region29: #{tpu_custom_call.1} parent=5 // pred_check
        _
      $region30: #{tpu_custom_call.1} parent=5 // pred_check_branch
        %189 = sbr.rel (%p186) target = $region32
      $region31: #{tpu_custom_call.1} parent=5 // pred_region
        %s190 = ssub.s32 %s16, 1
        %s191 = sand.u32 %s43, 1
        %s192 = scalar_lea.sflag [#allocation3], %s191
        %s193 = sand.u32 %s43, 1
        %s194 = smul.addr %s193, 256
        %s195 = scalar_lea.vmem [#allocation2], %s194
        // Predicated region
        $region33: #{tpu_custom_call.1} parent=31 // pred_check
          %p196 = pneg %p56
        $region34: #{tpu_custom_call.1} parent=31 // pred_check_branch
          %198 = sbr.rel (%p196) target = $region36
        $region35: #{tpu_custom_call.1} parent=31 // pred_region
          %199 = dma.done %s192, 4096
        $region36: #{tpu_custom_call.1} parent=31 // pred_fallthru
          _
        // Predicated region
        $region37: #{tpu_custom_call.1} parent=31 // pred_check
          %p200 = pneg %p77
        $region38: #{tpu_custom_call.1} parent=31 // pred_check_branch
          %202 = sbr.rel (%p200) target = $region40
        $region39: #{tpu_custom_call.1} parent=31 // pred_region
          %203 = dma.done [#allocation6], 2048
        $region40: #{tpu_custom_call.1} parent=31 // pred_fallthru
          _
        %s204 = sand.u32 %s43, 1
        %s205 = scalar_lea.sflag [#allocation3], %s204
        %s206 = sand.u32 %s43, 1
        %s207 = smul.addr %s206, 256
        %s208 = scalar_lea.vmem [#allocation2], %s207
        %p209 = pneg %p56
        %p210 = pneg %p53
        %p211 = pneg %p77
        %p212 = pneg %p74
        %p213 = pneg %p98
        %p214 = pneg %p95
        %p215 = pneg %p126
        %p216 = pneg %p123
        %s217 = sand.u32 %s113, 1
        %s218 = scalar_lea.sflag [#allocation4], %s217
        %s219 = sand.u32 %s113, 1
        %s220 = scalar_lea.vmem [#allocation7], %s219
        %s221 = smul.u32 32, %s26
        %v222 = vld [vmem:[%s195] sm:$0xff]
        %v223 = vld [vmem:[%s195 + $0x8] sm:$0xff]
        %v224 = vld [vmem:[%s195 + $0x10] sm:$0xff]
        %v225 = vld [vmem:[%s195 + $0x18] sm:$0xff]
        %v226 = vld [vmem:[%s195 + $0x20] sm:$0xff]
        %v227 = vld [vmem:[%s195 + $0x28] sm:$0xff]
        %v228 = vld [vmem:[%s195 + $0x30] sm:$0xff]
        %v229 = vld [vmem:[%s195 + $0x38] sm:$0xff]
        %v230 = vld [vmem:[%s195 + $0x40] sm:$0xff]
        %v231 = vld [vmem:[%s195 + $0x48] sm:$0xff]
        %v232 = vld [vmem:[%s195 + $0x50] sm:$0xff]
        %v233 = vld [vmem:[%s195 + $0x58] sm:$0xff]
        %v234 = vld [vmem:[%s195 + $0x60] sm:$0xff]
        %v235 = vld [vmem:[%s195 + $0x68] sm:$0xff]
        %v236 = vld [vmem:[%s195 + $0x70] sm:$0xff]
        %v237 = vld [vmem:[%s195 + $0x78] sm:$0xff]
        %v238 = vld [vmem:[%s195 + $0x80] sm:$0xff]
        %v239 = vld [vmem:[%s195 + $0x88] sm:$0xff]
        %v240 = vld [vmem:[%s195 + $0x90] sm:$0xff]
        %v241 = vld [vmem:[%s195 + $0x98] sm:$0xff]
        %v242 = vld [vmem:[%s195 + $0xa0] sm:$0xff]
        %v243 = vld [vmem:[%s195 + $0xa8] sm:$0xff]
        %v244 = vld [vmem:[%s195 + $0xb0] sm:$0xff]
        %v245 = vld [vmem:[%s195 + $0xb8] sm:$0xff]
        %v246 = vld [vmem:[%s195 + $0xc0] sm:$0xff]
        %v247 = vld [vmem:[%s195 + $0xc8] sm:$0xff]
        %v248 = vld [vmem:[%s195 + $0xd0] sm:$0xff]
        %v249 = vld [vmem:[%s195 + $0xd8] sm:$0xff]
        %v250 = vld [vmem:[%s195 + $0xe0] sm:$0xff]
        %v251 = vld [vmem:[%s195 + $0xe8] sm:$0xff]
        %v252 = vld [vmem:[%s195 + $0xf0] sm:$0xff]
        %v253 = vld [vmem:[%s195 + $0xf8] sm:$0xff]
        %v254 = vld [vmem:[#allocation5] sm:$0xff]
        %v255 = vld [vmem:[#allocation5 + $0x8] sm:$0xff]
        %v256 = vld [vmem:[#allocation5 + $0x10] sm:$0xff]
        %v257 = vld [vmem:[#allocation5 + $0x18] sm:$0xff]
        %v258 = vld [vmem:[#allocation5 + $0x20] sm:$0xff]
        %v259 = vld [vmem:[#allocation5 + $0x28] sm:$0xff]
        %v260 = vld [vmem:[#allocation5 + $0x30] sm:$0xff]
        %v261 = vld [vmem:[#allocation5 + $0x38] sm:$0xff]
        %v262 = vld [vmem:[#allocation5 + $0x40] sm:$0xff]
        %v263 = vld [vmem:[#allocation5 + $0x48] sm:$0xff]
        %v264 = vld [vmem:[#allocation5 + $0x50] sm:$0xff]
        %v265 = vld [vmem:[#allocation5 + $0x58] sm:$0xff]
        %v266 = vld [vmem:[#allocation5 + $0x60] sm:$0xff]
        %v267 = vld [vmem:[#allocation5 + $0x68] sm:$0xff]
        %v268 = vld [vmem:[#allocation5 + $0x70] sm:$0xff]
        %v269 = vld [vmem:[#allocation5 + $0x78] sm:$0xff]
        %v270 = vld [vmem:[%s2] sm:$0x1]
        %v272 = vlaneseq
        %v273 = vshrl.u32 %v272, 7
        %v274 = vsub.s32 0, %v273
        %v275 = vrot.slane %v270, %v274
        %277 = vmatprep.subr.mxu0 0.0
        %278 = vmatpush1.msra.mxu0 %v254
        %279 = vmatprep.subr.mxu0 0.0
        %280 = vmatpush1.msra.mxu0 %v255
        %281 = vmatprep.subr.mxu0 0.0
        %282 = vmatpush1.msra.mxu0 %v256
        %283 = vmatprep.subr.mxu0 0.0
        %284 = vmatpush1.msra.mxu0 %v257
        %285 = vmatprep.subr.mxu0 0.0
        %286 = vmatpush1.msra.mxu0 %v258
        %287 = vmatprep.subr.mxu0 0.0
        %288 = vmatpush1.msra.mxu0 %v259
        %289 = vmatprep.subr.mxu0 0.0
        %290 = vmatpush1.msra.mxu0 %v260
        %291 = vmatprep.subr.mxu0 0.0
        %292 = vmatpush1.msra.mxu0 %v261
        %293 = vmatprep.subr.mxu0 0.0
        %294 = vmatpush1.msra.mxu0 %v262
        %295 = vmatprep.subr.mxu0 0.0
        %296 = vmatpush1.msra.mxu0 %v263
        %297 = vmatprep.subr.mxu0 0.0
        %298 = vmatpush1.msra.mxu0 %v264
        %299 = vmatprep.subr.mxu0 0.0
        %300 = vmatpush1.msra.mxu0 %v265
        %301 = vmatprep.subr.mxu0 0.0
        %302 = vmatpush1.msra.mxu0 %v266
        %303 = vmatprep.subr.mxu0 0.0
        %304 = vmatpush1.msra.mxu0 %v267
        %305 = vmatprep.subr.mxu0 0.0
        %306 = vmatpush1.msra.mxu0 %v268
        %307 = vmatprep.subr.mxu0 0.0
        %308 = vmatpush1.msra.mxu0 %v269
        %309 = vmatprep.subr.mxu0 0.0
        %310 = vmatpush1.msra.mxu0 0.0
        %311 = vmatprep.subr.mxu0 0.0
        %312 = vmatpush1.msra.mxu0 0.0
        %313 = vmatprep.subr.mxu0 0.0
        %314 = vmatpush1.msra.mxu0 0.0
        %315 = vmatprep.subr.mxu0 0.0
        %316 = vmatpush1.msra.mxu0 0.0
        %317 = vmatprep.subr.mxu0 0.0
        %318 = vmatpush1.msra.mxu0 0.0
        %319 = vmatprep.subr.mxu0 0.0
        %320 = vmatpush1.msra.mxu0 0.0
        %321 = vmatprep.subr.mxu0 0.0
        %322 = vmatpush1.msra.mxu0 0.0
        %323 = vmatprep.subr.mxu0 0.0
        %324 = vmatpush1.msra.mxu0 0.0
        %325 = vmatprep.subr.mxu0 0.0
        %326 = vmatpush1.msra.mxu0 0.0
        %327 = vmatprep.subr.mxu0 0.0
        %328 = vmatpush1.msra.mxu0 0.0
        %329 = vmatprep.subr.mxu0 0.0
        %330 = vmatpush1.msra.mxu0 0.0
        %331 = vmatprep.subr.mxu0 0.0
        %332 = vmatpush1.msra.mxu0 0.0
        %333 = vmatprep.subr.mxu0 0.0
        %334 = vmatpush1.msra.mxu0 0.0
        %335 = vmatprep.subr.mxu0 0.0
        %336 = vmatpush1.msra.mxu0 0.0
        %337 = vmatprep.subr.mxu0 0.0
        %338 = vmatpush1.msra.mxu0 0.0
        %339 = vmatprep.subr.mxu0 0.0
        %340 = vmatpush1.msra.mxu0 0.0
        %341 = vmatprep.mubr.f32.mxu0 0.0
        %342 = vmatmul.mubr.f32.gmra.mrb[0].mxu0 %v222
        %v343 = vpop.f32.mrb[0].mxu0
        %v344 = vadd.f32 %v275, %v343
        %v345 = vpop.f32.mrb[0].mxu0
        %346 = vmatprep.mubr.f32.mxu0 0.0
        %347 = vmatmul.mubr.f32.gmra.mrb[0].mxu0 %v223
        %v348 = vpop.f32.mrb[0].mxu0
        %v349 = vadd.f32 %v275, %v348
        %v350 = vpop.f32.mrb[0].mxu0
        %351 = vmatprep.mubr.f32.mxu0 0.0
        %352 = vmatmul.mubr.f32.gmra.mrb[0].mxu0 %v224
        %v353 = vpop.f32.mrb[0].mxu0
        %v354 = vadd.f32 %v275, %v353
        %v355 = vpop.f32.mrb[0].mxu0
        %356 = vmatprep.mubr.f32.mxu0 0.0
        %357 = vmatmul.mubr.f32.gmra.mrb[0].mxu0 %v225
        %v358 = vpop.f32.mrb[0].mxu0
        %v359 = vadd.f32 %v275, %v358
        %v360 = vpop.f32.mrb[0].mxu0
        %361 = vmatprep.mubr.f32.mxu0 0.0
        %362 = vmatmul.mubr.f32.gmra.mrb[0].mxu0 %v226
        %v363 = vpop.f32.mrb[0].mxu0
        %v364 = vadd.f32 %v275, %v363
        %v365 = vpop.f32.mrb[0].mxu0
        %366 = vmatprep.mubr.f32.mxu0 0.0
        %367 = vmatmul.mubr.f32.gmra.mrb[0].mxu0 %v227
        %v368 = vpop.f32.mrb[0].mxu0
        %v369 = vadd.f32 %v275, %v368
        %v370 = vpop.f32.mrb[0].mxu0
        %371 = vmatprep.mubr.f32.mxu0 0.0
        %372 = vmatmul.mubr.f32.gmra.mrb[0].mxu0 %v228
        %v373 = vpop.f32.mrb[0].mxu0
        %v374 = vadd.f32 %v275, %v373
        %v375 = vpop.f32.mrb[0].mxu0
        %376 = vmatprep.mubr.f32.mxu0 0.0
        %377 = vmatmul.mubr.f32.gmra.mrb[0].mxu0 %v229
        %v378 = vpop.f32.mrb[0].mxu0
        %v379 = vadd.f32 %v275, %v378
        %v380 = vpop.f32.mrb[0].mxu0
        %381 = vmatprep.mubr.f32.mxu0 0.0
        %382 = vmatmul.mubr.f32.gmra.mrb[0].mxu0 %v230
        %v383 = vpop.f32.mrb[0].mxu0
        %v384 = vadd.f32 %v275, %v383
        %v385 = vpop.f32.mrb[0].mxu0
        %386 = vmatprep.mubr.f32.mxu0 0.0
        %387 = vmatmul.mubr.f32.gmra.mrb[0].mxu0 %v231
        %v388 = vpop.f32.mrb[0].mxu0
        %v389 = vadd.f32 %v275, %v388
        %v390 = vpop.f32.mrb[0].mxu0
        %391 = vmatprep.mubr.f32.mxu0 0.0
        %392 = vmatmul.mubr.f32.gmra.mrb[0].mxu0 %v232
        %v393 = vpop.f32.mrb[0].mxu0
        %v394 = vadd.f32 %v275, %v393
        %v395 = vpop.f32.mrb[0].mxu0
        %396 = vmatprep.mubr.f32.mxu0 0.0
        %397 = vmatmul.mubr.f32.gmra.mrb[0].mxu0 %v233
        %v398 = vpop.f32.mrb[0].mxu0
        %v399 = vadd.f32 %v275, %v398
        %v400 = vpop.f32.mrb[0].mxu0
        %401 = vmatprep.mubr.f32.mxu0 0.0
        %402 = vmatmul.mubr.f32.gmra.mrb[0].mxu0 %v234
        %v403 = vpop.f32.mrb[0].mxu0
        %v404 = vadd.f32 %v275, %v403
        %v405 = vpop.f32.mrb[0].mxu0
        %406 = vmatprep.mubr.f32.mxu0 0.0
        %407 = vmatmul.mubr.f32.gmra.mrb[0].mxu0 %v235
        %v408 = vpop.f32.mrb[0].mxu0
        %v409 = vadd.f32 %v275, %v408
        %v410 = vpop.f32.mrb[0].mxu0
        %411 = vmatprep.mubr.f32.mxu0 0.0
        %412 = vmatmul.mubr.f32.gmra.mrb[0].mxu0 %v236
        %v413 = vpop.f32.mrb[0].mxu0
        %v414 = vadd.f32 %v275, %v413
        %v415 = vpop.f32.mrb[0].mxu0
        %416 = vmatprep.mubr.f32.mxu0 0.0
        %417 = vmatmul.mubr.f32.gmra.mrb[0].mxu0 %v237
        %v418 = vpop.f32.mrb[0].mxu0
        %v419 = vadd.f32 %v275, %v418
        %v420 = vpop.f32.mrb[0].mxu0
        %421 = vmatprep.mubr.f32.mxu0 0.0
        %422 = vmatmul.mubr.f32.gmra.mrb[0].mxu0 %v238
        %v423 = vpop.f32.mrb[0].mxu0
        %v424 = vadd.f32 %v275, %v423
        %v425 = vpop.f32.mrb[0].mxu0
        %426 = vmatprep.mubr.f32.mxu0 0.0
        %427 = vmatmul.mubr.f32.gmra.mrb[0].mxu0 %v239
        %v428 = vpop.f32.mrb[0].mxu0
        %v429 = vadd.f32 %v275, %v428
        %v430 = vpop.f32.mrb[0].mxu0
        %431 = vmatprep.mubr.f32.mxu0 0.0
        %432 = vmatmul.mubr.f32.gmra.mrb[0].mxu0 %v240
        %v433 = vpop.f32.mrb[0].mxu0
        %v434 = vadd.f32 %v275, %v433
        %v435 = vpop.f32.mrb[0].mxu0
        %436 = vmatprep.mubr.f32.mxu0 0.0
        %437 = vmatmul.mubr.f32.gmra.mrb[0].mxu0 %v241
        %v438 = vpop.f32.mrb[0].mxu0
        %v439 = vadd.f32 %v275, %v438
        %v440 = vpop.f32.mrb[0].mxu0
        %441 = vmatprep.mubr.f32.mxu0 0.0
        %442 = vmatmul.mubr.f32.gmra.mrb[0].mxu0 %v242
        %v443 = vpop.f32.mrb[0].mxu0
        %v444 = vadd.f32 %v275, %v443
        %v445 = vpop.f32.mrb[0].mxu0
        %446 = vmatprep.mubr.f32.mxu0 0.0
        %447 = vmatmul.mubr.f32.gmra.mrb[0].mxu0 %v243
        %v448 = vpop.f32.mrb[0].mxu0
        %v449 = vadd.f32 %v275, %v448
        %v450 = vpop.f32.mrb[0].mxu0
        %451 = vmatprep.mubr.f32.mxu0 0.0
        %452 = vmatmul.mubr.f32.gmra.mrb[0].mxu0 %v244
        %v453 = vpop.f32.mrb[0].mxu0
        %v454 = vadd.f32 %v275, %v453
        %v455 = vpop.f32.mrb[0].mxu0
        %456 = vmatprep.mubr.f32.mxu0 0.0
        %457 = vmatmul.mubr.f32.gmra.mrb[0].mxu0 %v245
        %v458 = vpop.f32.mrb[0].mxu0
        %v459 = vadd.f32 %v275, %v458
        %v460 = vpop.f32.mrb[0].mxu0
        %461 = vmatprep.mubr.f32.mxu0 0.0
        %462 = vmatmul.mubr.f32.gmra.mrb[0].mxu0 %v246
        %v463 = vpop.f32.mrb[0].mxu0
        %v464 = vadd.f32 %v275, %v463
        %v465 = vpop.f32.mrb[0].mxu0
        %466 = vmatprep.mubr.f32.mxu0 0.0
        %467 = vmatmul.mubr.f32.gmra.mrb[0].mxu0 %v247
        %v468 = vpop.f32.mrb[0].mxu0
        %v469 = vadd.f32 %v275, %v468
        %v470 = vpop.f32.mrb[0].mxu0
        %471 = vmatprep.mubr.f32.mxu0 0.0
        %472 = vmatmul.mubr.f32.gmra.mrb[0].mxu0 %v248
        %v473 = vpop.f32.mrb[0].mxu0
        %v474 = vadd.f32 %v275, %v473
        %v475 = vpop.f32.mrb[0].mxu0
        %476 = vmatprep.mubr.f32.mxu0 0.0
        %477 = vmatmul.mubr.f32.gmra.mrb[0].mxu0 %v249
        %v478 = vpop.f32.mrb[0].mxu0
        %v479 = vadd.f32 %v275, %v478
        %v480 = vpop.f32.mrb[0].mxu0
        %481 = vmatprep.mubr.f32.mxu0 0.0
        %482 = vmatmul.mubr.f32.gmra.mrb[0].mxu0 %v250
        %v483 = vpop.f32.mrb[0].mxu0
        %v484 = vadd.f32 %v275, %v483
        %v485 = vpop.f32.mrb[0].mxu0
        %486 = vmatprep.mubr.f32.mxu0 0.0
        %487 = vmatmul.mubr.f32.gmra.mrb[0].mxu0 %v251
        %v488 = vpop.f32.mrb[0].mxu0
        %v489 = vadd.f32 %v275, %v488
        %v490 = vpop.f32.mrb[0].mxu0
        %491 = vmatprep.mubr.f32.mxu0 0.0
        %492 = vmatmul.mubr.f32.gmra.mrb[0].mxu0 %v252
        %v493 = vpop.f32.mrb[0].mxu0
        %v494 = vadd.f32 %v275, %v493
        %v495 = vpop.f32.mrb[0].mxu0
        %496 = vmatprep.mubr.f32.mxu0 0.0
        %497 = vmatmul.mubr.f32.gmra.mrb[0].mxu0 %v253
        %v498 = vpop.f32.mrb[0].mxu0
        %v499 = vadd.f32 %v275, %v498
        %v500 = vpop.f32.mrb[0].mxu0
        %501 = vdwg.mxu0
        %v502 = vmax.f32 %v344, 0.0
        %v503 = vmax.f32 %v349, 0.0
        %v504 = vmax.f32 %v354, 0.0
        %v505 = vmax.f32 %v359, 0.0
        %v506 = vmax.f32 %v364, 0.0
        %v507 = vmax.f32 %v369, 0.0
        %v508 = vmax.f32 %v374, 0.0
        %v509 = vmax.f32 %v379, 0.0
        %v510 = vmax.f32 %v384, 0.0
        %v511 = vmax.f32 %v389, 0.0
        %v512 = vmax.f32 %v394, 0.0
        %v513 = vmax.f32 %v399, 0.0
        %v514 = vmax.f32 %v404, 0.0
        %v515 = vmax.f32 %v409, 0.0
        %v516 = vmax.f32 %v414, 0.0
        %v517 = vmax.f32 %v419, 0.0
        %v518 = vmax.f32 %v424, 0.0
        %v519 = vmax.f32 %v429, 0.0
        %v520 = vmax.f32 %v434, 0.0
        %v521 = vmax.f32 %v439, 0.0
        %v522 = vmax.f32 %v444, 0.0
        %v523 = vmax.f32 %v449, 0.0
        %v524 = vmax.f32 %v454, 0.0
        %v525 = vmax.f32 %v459, 0.0
        %v526 = vmax.f32 %v464, 0.0
        %v527 = vmax.f32 %v469, 0.0
        %v528 = vmax.f32 %v474, 0.0
        %v529 = vmax.f32 %v479, 0.0
        %v530 = vmax.f32 %v484, 0.0
        %v531 = vmax.f32 %v489, 0.0
        %v532 = vmax.f32 %v494, 0.0
        %v533 = vmax.f32 %v499, 0.0
        %v534 = vadd.f32 %v502, %v503
        %v535 = vadd.f32 %v534, %v504
        %v536 = vadd.f32 %v535, %v505
        %v537 = vadd.f32 %v536, %v506
        %v538 = vadd.f32 %v537, %v507
        %v539 = vadd.f32 %v538, %v508
        %v540 = vadd.f32 %v539, %v509
        %v541 = vadd.f32 %v540, %v510
        %v542 = vadd.f32 %v541, %v511
        %v543 = vadd.f32 %v542, %v512
        %v544 = vadd.f32 %v543, %v513
        %v545 = vadd.f32 %v544, %v514
        %v546 = vadd.f32 %v545, %v515
        %v547 = vadd.f32 %v546, %v516
        %v548 = vadd.f32 %v547, %v517
        %v549 = vadd.f32 %v548, %v518
        %v550 = vadd.f32 %v549, %v519
        %v551 = vadd.f32 %v550, %v520
        %v552 = vadd.f32 %v551, %v521
        %v553 = vadd.f32 %v552, %v522
        %v554 = vadd.f32 %v553, %v523
        %v555 = vadd.f32 %v554, %v524
        %v556 = vadd.f32 %v555, %v525
        %v557 = vadd.f32 %v556, %v526
        %v558 = vadd.f32 %v557, %v527
        %v559 = vadd.f32 %v558, %v528
        %v560 = vadd.f32 %v559, %v529
        %v561 = vadd.f32 %v560, %v530
        %v562 = vadd.f32 %v561, %v531
        %v563 = vadd.f32 %v562, %v532
        %v564 = vadd.f32 %v563, %v533
        %v565 = vrot.slane %v564, 4
        %v566 = vadd.f32 %v564, %v565
        %v567 = vrot.slane %v566, 2
        %v568 = vadd.f32 %v566, %v567
        %v569 = vrot.slane %v568, 1
        %v570 = vadd.f32 %v568, %v569
        %571 = vst [vmem:[%s220] sm:$0x1] %v570
        %s572 = sand.u32 %s113, 1
        %s573 = scalar_lea.sflag [#allocation4], %s572
        %s574 = sand.u32 %s113, 1
        %s575 = scalar_lea.vmem [#allocation7], %s574
        // Predicated region
        $region41: #{tpu_custom_call.1} parent=31 // pred_check
          %p576 = pneg %p123
        $region42: #{tpu_custom_call.1} parent=31 // pred_check_branch
          %578 = sbr.rel (%p576) target = $region44
        $region43: #{tpu_custom_call.1} parent=31 // pred_region
          %s580 = ssub.s32 16, 16
          %581 = vsyncadd %s573, %s580
          %s582 = sadd.s32 %s26, %s25
          %s583 = smul.addr %s582, 16
          %s584 = scalar_lea.hbm %s3, %s583
          %s586 = sshll.u32 %s575, 4
          %s587 = int_to_ptr.vmem [resolvable:$true] %s586
          %589 = dma.vmem_to_hbm [thread:$0]  %s587, 16, %s584, %s573
        $region44: #{tpu_custom_call.1} parent=31 // pred_fallthru
          _
      $region32: #{tpu_custom_call.1} parent=5 // pred_fallthru
        _
      %p590 = scmp.le.s32.totalorder 2, %s16
      // Predicated region
      $region45: #{tpu_custom_call.1} parent=5 // pred_check
        %p591 = pneg %p590
      $region46: #{tpu_custom_call.1} parent=5 // pred_check_branch
        %593 = sbr.rel (%p591) target = $region48
      $region47: #{tpu_custom_call.1} parent=5 // pred_region
        %s594 = ssub.s32 %s16, 2
        // Predicated region
        $region49: #{tpu_custom_call.1} parent=47 // pred_check
          %p595 = pneg %p129
        $region50: #{tpu_custom_call.1} parent=47 // pred_check_branch
          %597 = sbr.rel (%p595) target = $region52
        $region51: #{tpu_custom_call.1} parent=47 // pred_region
          %s598 = sand.u32 %s114, 1
          %s599 = scalar_lea.sflag [#allocation4], %s598
          %s600 = sand.u32 %s114, 1
          %s601 = scalar_lea.vmem [#allocation7], %s600
          %602 = dma.done %s599, 16
        $region52: #{tpu_custom_call.1} parent=47 // pred_fallthru
          _
      $region48: #{tpu_custom_call.1} parent=5 // pred_fallthru
        _
    $region6: #{tpu_custom_call.1} parent=1 // loop_footer
      %s20 = sadd.s32 1, %s16
    $region7: #{tpu_custom_call.1} parent=1 // loop_footer_branch
      %15 = sbr.rel target = $region3
    $region8: #{tpu_custom_call.1} parent=1 // loop_exit
      _
    %603 = vsyncpa [#allocation3], 1
    %s604 = scalar_lea.sflag [#allocation3], 1
    %605 = vsyncpa %s604, 1
    %606 = vsyncpa [#allocation6], 1
    %607 = vsyncpa [#allocation4], 1
    %s608 = scalar_lea.sflag [#allocation4], 1
    %609 = vsyncpa %s608, 1

</llo_original>
